<compile_context>
chip_gen: v7x
topology: tpu7x:2x2x1
jax: 0.10.0
libtpu: 0.0.40
codegen_flags: <defaults>
</compile_context>

<pallas_src>
import functools

import jax
import jax.numpy as jnp
from jax.experimental import pallas as pl
from jax.experimental.pallas import tpu as pltpu


def _glimpse_kernel(fy_ref, fxT_ref, x_ref, out_ref, u_scr, r_scr, *, C, H, GW, G):
    """One grid point = one batch element; all G glimpses and all C channels.

    fy_ref  : VMEM (1, G, GH, H)    f32   row filterbanks (per glimpse)
    fxT_ref : VMEM (1, W, G*GW)     bf16  column filterbanks, G folded into N
    x_ref   : VMEM (1, C*H, W)      bf16  image, channels folded into rows
    out_ref : VMEM (1, G, GH, C*GW) f32   glimpses, lane-dense (C folded into N)
    u_scr   : VMEM (C*H, G*GW)      f32   stage-1 intermediate
    r_scr   : VMEM (H, C*GW)        f32   stage-2 RHS (shuffled view of u)
    """
    # ---- stage 1: contract over W once for all glimpses & channels ---------
    # Single fat MXU push per batch: (C*H, W) @ (W, G*GW) -> (C*H, G*GW), f32.
    u_scr[...] = jnp.dot(x_ref[0], fxT_ref[0],
                         preferred_element_type=jnp.float32)

    # ---- stage 2: per glimpse, ONE matmul with N = C*GW --------------------
    for g in range(G):                      # G is small & static -> unrolled
        # Shuffle u[(c,h), g-block] -> r[h, (c,:)] using only static ref
        # slices through VMEM scratch (C tiny 16x8 copies; vld/vst slots are
        # otherwise idle here, so this is effectively free filler).
        for c in range(C):
            r_scr[:, c * GW:(c + 1) * GW] = u_scr[c * H:(c + 1) * H,
                                                  g * GW:(g + 1) * GW]
        # (GH, H) @ (H, C*GW) -> (GH, C*GW), all f32 (no bf16 round-trip).
        out_ref[0, g] = jnp.dot(
            fy_ref[0, g], r_scr[...],
            preferred_element_type=jnp.float32).astype(out_ref.dtype)


def _gaussian_glimpse_pallas(x, fy, fxT, glimpse_size):
    """x: (B,C,H,W), fy: (B,G,GH,H), fxT: (B,G,W,GW) -> (B,G,C,GH,GW)."""
    B, C, H, W = x.shape
    G = fy.shape[1]
    GH, GW = glimpse_size

    # Wrapper-side layout plumbing (plain JAX, outside the kernel):
    #  * channels folded into x's rows, glimpses folded into fxT's columns,
    #  * fat matmul operands cast to bf16; tiny fy kept f32 for the f32 2nd
    #    contraction (better parity, no per-glimpse cast work in-kernel).
    x2 = jnp.reshape(x, (B, C * H, W)).astype(jnp.bfloat16)
    fxT_all = jnp.reshape(jnp.transpose(fxT, (0, 2, 1, 3)),
                          (B, W, G * GW)).astype(jnp.bfloat16)
    fy32 = fy.astype(jnp.float32)

    kernel = functools.partial(_glimpse_kernel, C=C, H=H, GW=GW, G=G)
    out = pl.pallas_call(
        kernel,
        out_shape=jax.ShapeDtypeStruct((B, G, GH, C * GW), jnp.float32),
        grid=(B,),
        in_specs=[
            # Last two dims of every block equal the full array dims -> legal
            # regardless of the (8,128) divisibility rule.
            pl.BlockSpec((1, G, GH, H), lambda i: (i, 0, 0, 0)),
            pl.BlockSpec((1, W, G * GW), lambda i: (i, 0, 0)),
            pl.BlockSpec((1, C * H, W), lambda i: (i, 0, 0)),
        ],
        out_specs=pl.BlockSpec((1, G, GH, C * GW), lambda i: (i, 0, 0, 0)),
        scratch_shapes=[
            pltpu.VMEM((C * H, G * GW), jnp.float32),
            pltpu.VMEM((H, C * GW), jnp.float32),
        ],
        compiler_params=pltpu.CompilerParams(
            dimension_semantics=("parallel",)),
    )(fy32, fxT_all, x2)

    # (B, G, GH, C*GW) -> (B, G, C, GH, GW): undo the lane-dense packing.
    out = jnp.transpose(out.reshape(B, G, GH, C, GW), (0, 1, 3, 2, 4))
    return out.astype(x.dtype)


class MultiscaleGlimpse:
    """JAX port of the PyTorch MultiscaleGlimpse module (gaussian glimpse)."""

    att_params = 6
    multiplier = jnp.ones((1, 6), jnp.float32)  # matches cuda(FloatTensor([[1]*6]))

    def __init__(self, **config):
        assert config["glimpse_type"] == "gaussian"
        self.glimpse_size = tuple(config["glimpse_size"])
        self.n_glimpses = int(config["n_glimpses"])

    def rescale(self, b, _flatten, image_hw):
        """Raw params -> pixel-space (cx, cy, dx, dy, sx, sy).

        DRAW-style: zeros map to a glimpse centered on the image spanning the
        full image with smooth Gaussian downsampling.
        """
        H, W = image_hw
        GH, GW = self.glimpse_size
        cx = (jnp.tanh(b[..., 0]) + 1.0) * 0.5 * (W - 1)
        cy = (jnp.tanh(b[..., 1]) + 1.0) * 0.5 * (H - 1)
        dx = jnp.exp(b[..., 2]) * (W - 1) / max(GW - 1, 1)
        dy = jnp.exp(b[..., 3]) * (H - 1) / max(GH - 1, 1)
        sx = jnp.exp(b[..., 4]) * 0.5 * dx
        sy = jnp.exp(b[..., 5]) * 0.5 * dy
        return jnp.stack([cx, cy, dx, dy, sx, sy], axis=-1), None

    def pixel_params(self, x, b=None):
        """b (B, 6) raw -> (B, G, 6) pixel-space (repeat * ones multiplier)."""
        B, _, H, W = x.shape
        if b is None:
            b = jnp.zeros((B, self.att_params), x.dtype)
        b_resc, _ = self.rescale(b[:, None], False, (H, W))          # (B, 1, 6)
        b_rep = jnp.tile(b_resc, (1, self.n_glimpses, 1))            # (B, G, 6)
        return (b_rep * self.multiplier[None]).astype(jnp.float32)

    def filterbanks(self, params, image_hw):
        """params (B,G,6) -> F_y (B,G,GH,H), F_x^T (B,G,W,GW). Plain JAX."""
        H, W = image_hw
        GH, GW = self.glimpse_size
        cx, cy, dx, dy, sx, sy = [params[..., k] for k in range(6)]   # (B,G) each

        gy = jnp.arange(GH, dtype=jnp.float32)
        gx = jnp.arange(GW, dtype=jnp.float32)
        ay = jnp.arange(H, dtype=jnp.float32)
        ax = jnp.arange(W, dtype=jnp.float32)

        mu_y = cy[..., None] + (gy - (GH - 1) * 0.5) * dy[..., None]  # (B,G,GH)
        mu_x = cx[..., None] + (gx - (GW - 1) * 0.5) * dx[..., None]  # (B,G,GW)

        fy = jnp.exp(-0.5 * jnp.square(
            (ay[None, None, None, :] - mu_y[..., None]) / sy[..., None, None]))
        fy = fy / (jnp.sum(fy, axis=-1, keepdims=True) + 1e-8)        # (B,G,GH,H)

        fx = jnp.exp(-0.5 * jnp.square(
            (ax[None, None, None, :] - mu_x[..., None]) / sx[..., None, None]))
        fx = fx / (jnp.sum(fx, axis=-1, keepdims=True) + 1e-8)        # (B,G,GW,W)
        fxT = jnp.swapaxes(fx, -1, -2)                                # (B,G,W,GW)
        return fy, fxT

    def __call__(self, x, b=None):
        _, _, H, W = x.shape
        params = self.pixel_params(x, b)
        fy, fxT = self.filterbanks(params, (H, W))
        g = _gaussian_glimpse_pallas(x, fy, fxT, self.glimpse_size)
        # Already (B, n_glimpses, C, GH, GW), matching the PyTorch .view(...).
        return g


if __name__ == "__main__":
    key = jax.random.PRNGKey(0)
    kx, kb = jax.random.split(key)

    B, C, H, W = 2, 4, 16, 16
    config = dict(glimpse_type="gaussian", glimpse_size=(8, 8), n_glimpses=2)

    x = jax.random.normal(kx, (B, C, H, W), dtype=jnp.float32)
    module = MultiscaleGlimpse(**config)

    def reference(x_in, b_in=None):
        # Pure-JAX reference (f32 throughout): g[b,g,c] = F_y @ x_c @ F_x^T
        p = module.pixel_params(x_in, b_in)
        fy, fxT = module.filterbanks(p, (H, W))
        return jnp.einsum("bgih,bchw,bgwj->bgcij", fy, x_in, fxT)

    # Default path (b=None -> zero attention params, like the PyTorch module).
    g0 = jax.block_until_ready(module(x))
    assert g0.shape == (B, config["n_glimpses"], C, 8, 8), g0.shape
    assert bool(jnp.all(jnp.isfinite(g0)))
    assert bool(jnp.allclose(g0, reference(x), atol=6e-2, rtol=6e-2))

    # Non-default attention params to exercise rescale + filterbank math.
    b_raw = 0.5 * jax.random.normal(kb, (B, MultiscaleGlimpse.att_params),
                                    dtype=jnp.float32)
    g1 = jax.block_until_ready(module(x, b_raw))
    assert g1.shape == (B, config["n_glimpses"], C, 8, 8), g1.shape
    assert bool(jnp.all(jnp.isfinite(g1)))
    assert bool(jnp.allclose(g1, reference(x, b_raw), atol=6e-2, rtol=6e-2))

    print("KERNEL_OK")
</pallas_src>

<mosaic_0001>
module attributes {stable_mosaic.version = 11 : i64} {
  func.func @_glimpse_kernel(%arg0: i32, %arg1: memref<1x2x8x16xf32, #tpu.memory_space<vmem>>, %arg2: memref<1x16x16xbf16, #tpu.memory_space<vmem>>, %arg3: memref<1x64x16xbf16, #tpu.memory_space<vmem>>, %arg4: memref<1x2x8x32xf32, #tpu.memory_space<vmem>>, %arg5: memref<64x16xf32, #tpu.memory_space<vmem>>, %arg6: memref<16x32xf32, #tpu.memory_space<vmem>>) attributes {dimension_semantics = [#tpu.dimension_semantics<parallel>], iteration_bounds = array<i64: 2>, scalar_prefetch = 0 : i64, scratch_operands = 2 : i64, tpu.core_type = #tpu.core_type<tc>, window_params = [{transform_indices = @transform_0, window_bounds = array<i64: 1, 2, 8, 16>}, {transform_indices = @transform_1, window_bounds = array<i64: 1, 16, 16>}, {transform_indices = @transform_2, window_bounds = array<i64: 1, 64, 16>}, {transform_indices = @transform_3, window_bounds = array<i64: 1, 2, 8, 32>}]} {
    %c0 = arith.constant 0 : index
    %c0_0 = arith.constant 0 : index
    %c0_1 = arith.constant 0 : index
    %0 = vector.load %arg3[%c0, %c0_0, %c0_1] : memref<1x64x16xbf16, #tpu.memory_space<vmem>>, vector<1x64x16xbf16>
    %1 = vector.shape_cast %0 : vector<1x64x16xbf16> to vector<64x16xbf16>
    %c0_2 = arith.constant 0 : index
    %c0_3 = arith.constant 0 : index
    %c0_4 = arith.constant 0 : index
    %2 = vector.load %arg2[%c0_2, %c0_3, %c0_4] : memref<1x16x16xbf16, #tpu.memory_space<vmem>>, vector<1x16x16xbf16>
    %3 = vector.shape_cast %2 : vector<1x16x16xbf16> to vector<16x16xbf16>
    %cst = arith.constant dense<0.000000e+00> : vector<64x16xf32>
    %4 = tpu.matmul %1, %3, %cst {dimension_numbers = #tpu.dot_dimension_numbers<[1], [0], [0], [1], [0, 0, 1, 1], [], []>} : vector<64x16xbf16>, vector<16x16xbf16>, vector<64x16xf32> -> vector<64x16xf32>
    %c0_5 = arith.constant 0 : index
    %c0_6 = arith.constant 0 : index
    %5 = vector.load %arg5[%c0_5, %c0_6] : memref<64x16xf32, #tpu.memory_space<vmem>>, vector<64x16xf32>
    tpu.vector_store %arg5[%c0_5, %c0_6], %4 {strides = array<i32>} : memref<64x16xf32, #tpu.memory_space<vmem>>, vector<64x16xf32>,
    %c0_7 = arith.constant 0 : index
    %c0_8 = arith.constant 0 : index
    %6 = vector.load %arg5[%c0_7, %c0_8] : memref<64x16xf32, #tpu.memory_space<vmem>>, vector<16x8xf32>
    %c0_9 = arith.constant 0 : index
    %c0_10 = arith.constant 0 : index
    %7 = vector.load %arg6[%c0_9, %c0_10] : memref<16x32xf32, #tpu.memory_space<vmem>>, vector<16x8xf32>
    tpu.vector_store %arg6[%c0_9, %c0_10], %6 {strides = array<i32>} : memref<16x32xf32, #tpu.memory_space<vmem>>, vector<16x8xf32>,
    %c16 = arith.constant 16 : index
    %c0_11 = arith.constant 0 : index
    %8 = vector.load %arg5[%c16, %c0_11] : memref<64x16xf32, #tpu.memory_space<vmem>>, vector<16x8xf32>
    %c0_12 = arith.constant 0 : index
    %c8 = arith.constant 8 : index
    %9 = vector.load %arg6[%c0_12, %c8] : memref<16x32xf32, #tpu.memory_space<vmem>>, vector<16x8xf32>
    tpu.vector_store %arg6[%c0_12, %c8], %8 {strides = array<i32>} : memref<16x32xf32, #tpu.memory_space<vmem>>, vector<16x8xf32>,
    %c32 = arith.constant 32 : index
    %c0_13 = arith.constant 0 : index
    %10 = vector.load %arg5[%c32, %c0_13] : memref<64x16xf32, #tpu.memory_space<vmem>>, vector<16x8xf32>
    %c0_14 = arith.constant 0 : index
    %c16_15 = arith.constant 16 : index
    %11 = vector.load %arg6[%c0_14, %c16_15] : memref<16x32xf32, #tpu.memory_space<vmem>>, vector<16x8xf32>
    tpu.vector_store %arg6[%c0_14, %c16_15], %10 {strides = array<i32>} : memref<16x32xf32, #tpu.memory_space<vmem>>, vector<16x8xf32>,
    %c48 = arith.constant 48 : index
    %c0_16 = arith.constant 0 : index
    %12 = vector.load %arg5[%c48, %c0_16] : memref<64x16xf32, #tpu.memory_space<vmem>>, vector<16x8xf32>
    %c0_17 = arith.constant 0 : index
    %c24 = arith.constant 24 : index
    %13 = vector.load %arg6[%c0_17, %c24] : memref<16x32xf32, #tpu.memory_space<vmem>>, vector<16x8xf32>
    tpu.vector_store %arg6[%c0_17, %c24], %12 {strides = array<i32>} : memref<16x32xf32, #tpu.memory_space<vmem>>, vector<16x8xf32>,
    %c0_18 = arith.constant 0 : index
    %c0_19 = arith.constant 0 : index
    %c0_20 = arith.constant 0 : index
    %c0_21 = arith.constant 0 : index
    %14 = vector.load %arg1[%c0_18, %c0_19, %c0_20, %c0_21] : memref<1x2x8x16xf32, #tpu.memory_space<vmem>>, vector<1x1x8x16xf32>
    %15 = vector.shape_cast %14 : vector<1x1x8x16xf32> to vector<8x16xf32>
    %c0_22 = arith.constant 0 : index
    %c0_23 = arith.constant 0 : index
    %16 = vector.load %arg6[%c0_22, %c0_23] : memref<16x32xf32, #tpu.memory_space<vmem>>, vector<16x32xf32>
    %cst_24 = arith.constant dense<0.000000e+00> : vector<8x32xf32>
    %17 = tpu.matmul %15, %16, %cst_24 {dimension_numbers = #tpu.dot_dimension_numbers<[1], [0], [0], [1], [0, 0, 1, 1], [], []>} : vector<8x16xf32>, vector<16x32xf32>, vector<8x32xf32> -> vector<8x32xf32>
    %c0_25 = arith.constant 0 : index
    %c0_26 = arith.constant 0 : index
    %c0_27 = arith.constant 0 : index
    %c0_28 = arith.constant 0 : index
    %18 = vector.load %arg4[%c0_25, %c0_26, %c0_27, %c0_28] : memref<1x2x8x32xf32, #tpu.memory_space<vmem>>, vector<1x1x8x32xf32>
    %19 = vector.shape_cast %18 : vector<1x1x8x32xf32> to vector<8x32xf32>
    %20 = vector.shape_cast %17 : vector<8x32xf32> to vector<1x1x8x32xf32>
    tpu.vector_store %arg4[%c0_25, %c0_26, %c0_27, %c0_28], %20 {strides = array<i32>} : memref<1x2x8x32xf32, #tpu.memory_space<vmem>>, vector<1x1x8x32xf32>,
    %c0_29 = arith.constant 0 : index
    %c8_30 = arith.constant 8 : index
    %21 = vector.load %arg5[%c0_29, %c8_30] : memref<64x16xf32, #tpu.memory_space<vmem>>, vector<16x8xf32>
    %c0_31 = arith.constant 0 : index
    %c0_32 = arith.constant 0 : index
    %22 = vector.load %arg6[%c0_31, %c0_32] : memref<16x32xf32, #tpu.memory_space<vmem>>, vector<16x8xf32>
    tpu.vector_store %arg6[%c0_31, %c0_32], %21 {strides = array<i32>} : memref<16x32xf32, #tpu.memory_space<vmem>>, vector<16x8xf32>,
    %c16_33 = arith.constant 16 : index
    %c8_34 = arith.constant 8 : index
    %23 = vector.load %arg5[%c16_33, %c8_34] : memref<64x16xf32, #tpu.memory_space<vmem>>, vector<16x8xf32>
    %c0_35 = arith.constant 0 : index
    %c8_36 = arith.constant 8 : index
    %24 = vector.load %arg6[%c0_35, %c8_36] : memref<16x32xf32, #tpu.memory_space<vmem>>, vector<16x8xf32>
    tpu.vector_store %arg6[%c0_35, %c8_36], %23 {strides = array<i32>} : memref<16x32xf32, #tpu.memory_space<vmem>>, vector<16x8xf32>,
    %c32_37 = arith.constant 32 : index
    %c8_38 = arith.constant 8 : index
    %25 = vector.load %arg5[%c32_37, %c8_38] : memref<64x16xf32, #tpu.memory_space<vmem>>, vector<16x8xf32>
    %c0_39 = arith.constant 0 : index
    %c16_40 = arith.constant 16 : index
    %26 = vector.load %arg6[%c0_39, %c16_40] : memref<16x32xf32, #tpu.memory_space<vmem>>, vector<16x8xf32>
    tpu.vector_store %arg6[%c0_39, %c16_40], %25 {strides = array<i32>} : memref<16x32xf32, #tpu.memory_space<vmem>>, vector<16x8xf32>,
    %c48_41 = arith.constant 48 : index
    %c8_42 = arith.constant 8 : index
    %27 = vector.load %arg5[%c48_41, %c8_42] : memref<64x16xf32, #tpu.memory_space<vmem>>, vector<16x8xf32>
    %c0_43 = arith.constant 0 : index
    %c24_44 = arith.constant 24 : index
    %28 = vector.load %arg6[%c0_43, %c24_44] : memref<16x32xf32, #tpu.memory_space<vmem>>, vector<16x8xf32>
    tpu.vector_store %arg6[%c0_43, %c24_44], %27 {strides = array<i32>} : memref<16x32xf32, #tpu.memory_space<vmem>>, vector<16x8xf32>,
    %c0_45 = arith.constant 0 : index
    %c1 = arith.constant 1 : index
    %c0_46 = arith.constant 0 : index
    %c0_47 = arith.constant 0 : index
    %29 = vector.load %arg1[%c0_45, %c1, %c0_46, %c0_47] : memref<1x2x8x16xf32, #tpu.memory_space<vmem>>, vector<1x1x8x16xf32>
    %30 = vector.shape_cast %29 : vector<1x1x8x16xf32> to vector<8x16xf32>
    %c0_48 = arith.constant 0 : index
    %c0_49 = arith.constant 0 : index
    %31 = vector.load %arg6[%c0_48, %c0_49] : memref<16x32xf32, #tpu.memory_space<vmem>>, vector<16x32xf32>
    %cst_50 = arith.constant dense<0.000000e+00> : vector<8x32xf32>
    %32 = tpu.matmul %30, %31, %cst_50 {dimension_numbers = #tpu.dot_dimension_numbers<[1], [0], [0], [1], [0, 0, 1, 1], [], []>} : vector<8x16xf32>, vector<16x32xf32>, vector<8x32xf32> -> vector<8x32xf32>
    %c0_51 = arith.constant 0 : index
    %c1_52 = arith.constant 1 : index
    %c0_53 = arith.constant 0 : index
    %c0_54 = arith.constant 0 : index
    %33 = vector.load %arg4[%c0_51, %c1_52, %c0_53, %c0_54] : memref<1x2x8x32xf32, #tpu.memory_space<vmem>>, vector<1x1x8x32xf32>
    %34 = vector.shape_cast %33 : vector<1x1x8x32xf32> to vector<8x32xf32>
    %35 = vector.shape_cast %32 : vector<8x32xf32> to vector<1x1x8x32xf32>
    tpu.vector_store %arg4[%c0_51, %c1_52, %c0_53, %c0_54], %35 {strides = array<i32>} : memref<1x2x8x32xf32, #tpu.memory_space<vmem>>, vector<1x1x8x32xf32>,
    return
  }
  func.func @transform_0(%arg0: i32) -> (i32, i32, i32, i32) {
    %c0_i32 = arith.constant 0 : i32
    %c0_i32_0 = arith.constant 0 : i32
    %c0_i32_1 = arith.constant 0 : i32
    %c0_i32_2 = arith.constant 0 : i32
    return %arg0, %c0_i32, %c0_i32_0, %c0_i32_1 : i32, i32, i32, i32
  }
  func.func @transform_1(%arg0: i32) -> (i32, i32, i32) {
    %c0_i32 = arith.constant 0 : i32
    %c0_i32_0 = arith.constant 0 : i32
    %c0_i32_1 = arith.constant 0 : i32
    return %arg0, %c0_i32, %c0_i32_0 : i32, i32, i32
  }
  func.func @transform_2(%arg0: i32) -> (i32, i32, i32) {
    %c0_i32 = arith.constant 0 : i32
    %c0_i32_0 = arith.constant 0 : i32
    %c0_i32_1 = arith.constant 0 : i32
    return %arg0, %c0_i32, %c0_i32_0 : i32, i32, i32
  }
  func.func @transform_3(%arg0: i32) -> (i32, i32, i32, i32) {
    %c0_i32 = arith.constant 0 : i32
    %c0_i32_0 = arith.constant 0 : i32
    %c0_i32_1 = arith.constant 0 : i32
    %c0_i32_2 = arith.constant 0 : i32
    return %arg0, %c0_i32, %c0_i32_0, %c0_i32_1 : i32, i32, i32, i32
  }
}

</mosaic_0001>

<llo_original>
// kernel: tpu_custom_call.1
$region0: #{tpu_custom_call.1}
  #allocation0 [shape = 'u32[]', space=smem, size = 0x4, offset = 0x4, fixed_abs, tag = 'smem constant byte address 0x4 - core index']
  #allocation1 [shape = 'u32[144,128]{1,0:T(1,128)}', space=vmem, size = 0x12000, scoped, tag = 'internal scratch']
  #allocation2 [shape = 'f32[64,16]{1,0:T(8,128)}', space=vmem, size = 0x8000, scoped, tag = 'scratch operand']
  #allocation3 [shape = 'f32[16,32]{1,0:T(8,128)}', space=vmem, size = 0x2000, scoped, tag = 'scratch operand']
  %s0 = inlined_call_operand.vmem [shape: f32[2,2,8,16], index: 0, kind: input, shape index: {}]
  %s1 = inlined_call_operand.vmem [shape: bf16[2,16,16], index: 1, kind: input, shape index: {}]
  %s2 = inlined_call_operand.vmem [shape: bf16[2,64,16], index: 2, kind: input, shape index: {}]
  %s3 = inlined_call_operand.hbm [shape: f32[2,2,8,32], index: 3, kind: output, shape index: {}]
  %s4 = sld [smem:[#allocation0]]
  $region45: #{tpu_custom_call.1} parent=0
    _
  %s6 = ssub.s32 1, %s4
  %s7 = scalar_select 0, %s6, %s4
  $region1: #{tpu_custom_call.1} parent=0
    #allocation4 [shape = 'u8[16384]{0}', space=vmem, size = 0x4000, scoped, tag = 'output window, operand 0']
    #allocation5 [shape = 's32[2]{0}', space=sflag, size = 0x8, scoped, tag = 'scoped memory for tpu_custom_call.1']
    %8 = vsyncpa [#allocation5], 0
    %s9 = scalar_lea.sflag [#allocation5], 1
    %10 = vsyncpa %s9, 0
    loop: start=0, step=1, limit=4
    $region2: #{tpu_custom_call.1} parent=1 // loop_pre_header
      _
    $region3: #{tpu_custom_call.1} parent=1 // loop_header
      %s12 = sphi 0, %s16
      %p13 = scmp.ge.s32.totalorder %s12, 4
      %s22 = sphi 0, %s24
      %s25 = sphi 0, %s22
      %s26 = sphi 0, %s25
      %s42 = sphi 0, %s26
      %s48 = sphi 0, %s50
      %s51 = sphi 0, %s48
      %s52 = sphi 0, %s51
      %s68 = sphi 0, %s52
      %s74 = sphi 0, %s76
      %s77 = sphi 0, %s74
      %s78 = sphi 0, %s77
      %s94 = sphi 0, %s78
      %s100 = sphi 0, %s102
      %s103 = sphi 0, %s100
      %s104 = sphi 0, %s103
      %s120 = sphi 0, %s104
    $region4: #{tpu_custom_call.1} parent=1 // loop_header_branch
      %15 = sbr.rel (%p13) target = $region8
    $region5: #{tpu_custom_call.1} parent=1 // loop_body
      %s17 = ssub.s32 %s12, 1
      %s18 = ssub.s32 %s12, 2
      %s19 = sadd.s32 %s12, 1
      %s20 = ssub.s32 %s12, %s19
      %p21 = scmp.eq.s32.totalorder %s20, 0
      %s23 = sadd.s32 %s22, 1
      %s24 = scalar_select %p21, %s22, %s23
      %p27 = pneg %p21
      %p28 = scmp.eq.s32.totalorder %s12, 1
      %p29 = por %p27, %p28
      %p30 = scmp.ne.s32.totalorder %s22, %s25
      %p31 = scmp.eq.s32.totalorder %s12, 0
      %p32 = por %p30, %p31
      %p33 = scmp.ne.s32.totalorder %s22, %s25
      %p34 = scmp.eq.s32.totalorder %s17, 1
      %p35 = por %p33, %p34
      %p36 = scmp.ne.s32.totalorder %s25, %s26
      %p37 = scmp.eq.s32.totalorder %s17, 0
      %p38 = por %p36, %p37
      %p39 = scmp.ne.s32.totalorder %s25, %s26
      %p40 = scmp.eq.s32.totalorder %s18, 1
      %p41 = por %p39, %p40
      %p43 = scmp.ne.s32.totalorder %s26, %s42
      %p44 = scmp.eq.s32.totalorder %s18, 0
      %p45 = por %p43, %p44
      %s46 = ssub.s32 %s12, %s19
      %p47 = scmp.eq.s32.totalorder %s46, 0
      %s49 = sadd.s32 %s48, 1
      %s50 = scalar_select %p47, %s48, %s49
      %p53 = pneg %p47
      %p54 = scmp.eq.s32.totalorder %s12, 1
      %p55 = por %p53, %p54
      %p56 = scmp.ne.s32.totalorder %s48, %s51
      %p57 = scmp.eq.s32.totalorder %s12, 0
      %p58 = por %p56, %p57
      %p59 = scmp.ne.s32.totalorder %s48, %s51
      %p60 = scmp.eq.s32.totalorder %s17, 1
      %p61 = por %p59, %p60
      %p62 = scmp.ne.s32.totalorder %s51, %s52
      %p63 = scmp.eq.s32.totalorder %s17, 0
      %p64 = por %p62, %p63
      %p65 = scmp.ne.s32.totalorder %s51, %s52
      %p66 = scmp.eq.s32.totalorder %s18, 1
      %p67 = por %p65, %p66
      %p69 = scmp.ne.s32.totalorder %s52, %s68
      %p70 = scmp.eq.s32.totalorder %s18, 0
      %p71 = por %p69, %p70
      %s72 = ssub.s32 %s12, %s19
      %p73 = scmp.eq.s32.totalorder %s72, 0
      %s75 = sadd.s32 %s74, 1
      %s76 = scalar_select %p73, %s74, %s75
      %p79 = pneg %p73
      %p80 = scmp.eq.s32.totalorder %s12, 1
      %p81 = por %p79, %p80
      %p82 = scmp.ne.s32.totalorder %s74, %s77
      %p83 = scmp.eq.s32.totalorder %s12, 0
      %p84 = por %p82, %p83
      %p85 = scmp.ne.s32.totalorder %s74, %s77
      %p86 = scmp.eq.s32.totalorder %s17, 1
      %p87 = por %p85, %p86
      %p88 = scmp.ne.s32.totalorder %s77, %s78
      %p89 = scmp.eq.s32.totalorder %s17, 0
      %p90 = por %p88, %p89
      %p91 = scmp.ne.s32.totalorder %s77, %s78
      %p92 = scmp.eq.s32.totalorder %s18, 1
      %p93 = por %p91, %p92
      %p95 = scmp.ne.s32.totalorder %s78, %s94
      %p96 = scmp.eq.s32.totalorder %s18, 0
      %p97 = por %p95, %p96
      %s98 = ssub.s32 %s12, %s19
      %p99 = scmp.eq.s32.totalorder %s98, 0
      %s101 = sadd.s32 %s100, 1
      %s102 = scalar_select %p99, %s100, %s101
      %p105 = pneg %p99
      %p106 = scmp.eq.s32.totalorder %s12, 1
      %p107 = por %p105, %p106
      %p108 = scmp.ne.s32.totalorder %s100, %s103
      %p109 = scmp.eq.s32.totalorder %s12, 0
      %p110 = por %p108, %p109
      %p111 = scmp.ne.s32.totalorder %s100, %s103
      %p112 = scmp.eq.s32.totalorder %s17, 1
      %p113 = por %p111, %p112
      %p114 = scmp.ne.s32.totalorder %s103, %s104
      %p115 = scmp.eq.s32.totalorder %s17, 0
      %p116 = por %p114, %p115
      %p117 = scmp.ne.s32.totalorder %s103, %s104
      %p118 = scmp.eq.s32.totalorder %s18, 1
      %p119 = por %p117, %p118
      %p121 = scmp.ne.s32.totalorder %s104, %s120
      %p122 = scmp.eq.s32.totalorder %s18, 0
      %p123 = por %p121, %p122
      %p124 = scmp.le.s32.totalorder 1, %s12
      %p125 = scmp.lt.s32.totalorder %s12, 3
      %p126 = pnand %p124, %p125
      %p127 = pneg %p126
      // Predicated region
      $region9: #{tpu_custom_call.1} parent=5 // pred_check
        _
      $region10: #{tpu_custom_call.1} parent=5 // pred_check_branch
        %129 = sbr.rel (%p126) target = $region12
      $region11: #{tpu_custom_call.1} parent=5 // pred_region
        %s130 = ssub.s32 %s12, 1
      $region12: #{tpu_custom_call.1} parent=5 // pred_fallthru
        _
      %p131 = scmp.lt.s32.totalorder %s12, 2
      // Predicated region
      $region13: #{tpu_custom_call.1} parent=5 // pred_check
        %p132 = pneg %p131
      $region14: #{tpu_custom_call.1} parent=5 // pred_check_branch
        %134 = sbr.rel (%p132) target = $region16
      $region15: #{tpu_custom_call.1} parent=5 // pred_region
        // Predicated region
        $region17: #{tpu_custom_call.1} parent=15 // pred_check
          %p135 = pneg %p32
        $region18: #{tpu_custom_call.1} parent=15 // pred_check_branch
          %137 = sbr.rel (%p135) target = $region20
        $region19: #{tpu_custom_call.1} parent=15 // pred_region
          %p138 = scmp.lt.s32.totalorder %s12, 1
          %s139 = scalar_select %p138, %s12, 1
          %s140 = smul.addr %s139, 2
          %s141 = smul.addr %s140, 8
          %s142 = scalar_lea.vmem %s0, %s141
        $region20: #{tpu_custom_call.1} parent=15 // pred_fallthru
          _
        // Predicated region
        $region21: #{tpu_custom_call.1} parent=15 // pred_check
          %p143 = pneg %p58
        $region22: #{tpu_custom_call.1} parent=15 // pred_check_branch
          %145 = sbr.rel (%p143) target = $region24
        $region23: #{tpu_custom_call.1} parent=15 // pred_region
          %p146 = scmp.lt.s32.totalorder %s12, 1
          %s147 = scalar_select %p146, %s12, 1
          %s148 = smul.addr %s147, 2
          %s149 = smul.addr %s148, 4
          %s150 = scalar_lea.vmem %s1, %s149
        $region24: #{tpu_custom_call.1} parent=15 // pred_fallthru
          _
        // Predicated region
        $region25: #{tpu_custom_call.1} parent=15 // pred_check
          %p151 = pneg %p84
        $region26: #{tpu_custom_call.1} parent=15 // pred_check_branch
          %153 = sbr.rel (%p151) target = $region28
        $region27: #{tpu_custom_call.1} parent=15 // pred_region
          %p154 = scmp.lt.s32.totalorder %s12, 1
          %s155 = scalar_select %p154, %s12, 1
          %s156 = smul.addr %s155, 8
          %s157 = smul.addr %s156, 4
          %s158 = scalar_lea.vmem %s2, %s157
        $region28: #{tpu_custom_call.1} parent=15 // pred_fallthru
          _
      $region16: #{tpu_custom_call.1} parent=5 // pred_fallthru
        _
      %p159 = scmp.le.s32.totalorder 1, %s12
      %p160 = scmp.lt.s32.totalorder %s12, 3
      %p161 = pnand %p159, %p160
      %p162 = pneg %p161
      // Predicated region
      $region29: #{tpu_custom_call.1} parent=5 // pred_check
        _
      $region30: #{tpu_custom_call.1} parent=5 // pred_check_branch
        %164 = sbr.rel (%p161) target = $region32
      $region31: #{tpu_custom_call.1} parent=5 // pred_region
        %s165 = ssub.s32 %s12, 1
        %p166 = scmp.lt.s32.totalorder %s17, 1
        %s167 = scalar_select %p166, %s17, 1
        %s168 = smul.addr %s167, 2
        %s169 = smul.addr %s168, 8
        %s170 = scalar_lea.vmem %s0, %s169
        %p171 = pneg %p38
        %p172 = pneg %p35
        %p173 = scmp.lt.s32.totalorder %s17, 1
        %s174 = scalar_select %p173, %s17, 1
        %s175 = smul.addr %s174, 2
        %s176 = smul.addr %s175, 4
        %s177 = scalar_lea.vmem %s1, %s176
        %p178 = pneg %p64
        %p179 = pneg %p61
        %p180 = scmp.lt.s32.totalorder %s17, 1
        %s181 = scalar_select %p180, %s17, 1
        %s182 = smul.addr %s181, 8
        %s183 = smul.addr %s182, 4
        %s184 = scalar_lea.vmem %s2, %s183
        %p185 = pneg %p90
        %p186 = pneg %p87
        %p187 = pneg %p116
        %p188 = pneg %p113
        %s189 = sand.u32 %s103, 1
        %s190 = scalar_lea.sflag [#allocation5], %s189
        %s191 = sand.u32 %s103, 1
        %s192 = smul.addr %s191, 16
        %s193 = scalar_lea.vmem [#allocation4], %s192
        %p194 = scmp.lt.s32.totalorder %s17, 1
        %s195 = scalar_select %p194, %s17, 1
        %s196 = smul.addr %s195, 2
        %s197 = smul.addr %s196, 8
        %s198 = scalar_lea.vmem %s0, %s197
        %p199 = scmp.lt.s32.totalorder %s17, 1
        %s200 = scalar_select %p199, %s17, 1
        %s201 = smul.addr %s200, 2
        %s202 = smul.addr %s201, 4
        %s203 = scalar_lea.vmem %s1, %s202
        %p204 = scmp.lt.s32.totalorder %s17, 1
        %s205 = scalar_select %p204, %s17, 1
        %s206 = smul.addr %s205, 8
        %s207 = smul.addr %s206, 4
        %s208 = scalar_lea.vmem %s2, %s207
        %v210 = vld [vmem:[%s208] sm:$0xf]
        %v211 = vld [vmem:[%s208 + $0x4] sm:$0xf]
        %v212 = vld [vmem:[%s208 + $0x8] sm:$0xf]
        %v213 = vld [vmem:[%s208 + $0xc] sm:$0xf]
        %v214 = vld [vmem:[%s208 + $0x10] sm:$0xf]
        %v215 = vld [vmem:[%s208 + $0x14] sm:$0xf]
        %v216 = vld [vmem:[%s208 + $0x18] sm:$0xf]
        %v217 = vld [vmem:[%s208 + $0x1c] sm:$0xf]
        %v218 = vld [vmem:[%s203] sm:$0xf]
        %v219 = vld [vmem:[%s203 + $0x4] sm:$0xf]
        %v228 = vunpack.c.l.b16 %v210
        %v229 = vunpack.c.l.b16 %v211
        %v230 = vunpack.c.l.b16 %v212
        %v231 = vunpack.c.l.b16 %v213
        %v232 = vunpack.c.l.b16 %v214
        %v233 = vunpack.c.l.b16 %v215
        %v234 = vunpack.c.l.b16 %v216
        %v235 = vunpack.c.l.b16 %v217
        %v236 = vpack.c.b16 %v229, %v228
        %v237 = vpack.c.b16 %v231, %v230
        %v238 = vpack.c.b16 %v233, %v232
        %v239 = vpack.c.b16 %v235, %v234
        %v242 = vunpack.c.l.b16 %v218
        %v243 = vunpack.c.l.b16 %v219
        %v244 = vpack.c.b16 %v243, %v242
        %vm246 = vcmask 130048
        %v248 = vsel %vm246, %v236, 0
        %v251 = vsel %vm246, %v237, 0
        %v254 = vsel %vm246, %v238, 0
        %v257 = vsel %vm246, %v239, 0
        %259 = vmatprep.subr.bf16.mxu0 0
        %260 = vmatpush1.bf16.msra.mxu0 %v244
        %261 = vmatprep.subr.bf16.mxu0 0
        %262 = vmatpush1.bf16.msra.mxu0 0
        %263 = vmatprep.subr.bf16.mxu0 0
        %264 = vmatpush1.bf16.msra.mxu0 0
        %265 = vmatprep.subr.bf16.mxu0 0
        %266 = vmatpush1.bf16.msra.mxu0 0
        %267 = vmatprep.subr.bf16.mxu0 0
        %268 = vmatpush1.bf16.msra.mxu0 0
        %269 = vmatprep.subr.bf16.mxu0 0
        %270 = vmatpush1.bf16.msra.mxu0 0
        %271 = vmatprep.subr.bf16.mxu0 0
        %272 = vmatpush1.bf16.msra.mxu0 0
        %273 = vmatprep.subr.bf16.mxu0 0
        %274 = vmatpush1.bf16.msra.mxu0 0
        %275 = vmatprep.subr.bf16.mxu0 0
        %276 = vmatpush1.bf16.msra.mxu0 0
        %277 = vmatprep.subr.bf16.mxu0 0
        %278 = vmatpush1.bf16.msra.mxu0 0
        %279 = vmatprep.subr.bf16.mxu0 0
        %280 = vmatpush1.bf16.msra.mxu0 0
        %281 = vmatprep.subr.bf16.mxu0 0
        %282 = vmatpush1.bf16.msra.mxu0 0
        %283 = vmatprep.subr.bf16.mxu0 0
        %284 = vmatpush1.bf16.msra.mxu0 0
        %285 = vmatprep.subr.bf16.mxu0 0
        %286 = vmatpush1.bf16.msra.mxu0 0
        %287 = vmatprep.subr.bf16.mxu0 0
        %288 = vmatpush1.bf16.msra.mxu0 0
        %289 = vmatprep.subr.bf16.mxu0 0
        %290 = vmatpush1.bf16.msra.mxu0 0
        %291 = vmatprep.mubr.bf16.mxu0 0
        %292 = vmatmul.mubr.bf16.gmra.mrb[0].mxu0 %v248
        %v293 = vpop.f32.mrb[0].mxu0
        %v294 = vadd.f32 0.0, %v293
        %v295 = vpop.f32.mrb[0].mxu0
        %v296 = vpop.f32.mrb[0].mxu0
        %v297 = vadd.f32 0.0, %v296
        %v298 = vpop.f32.mrb[0].mxu0
        %299 = vmatprep.mubr.bf16.mxu0 0
        %300 = vmatmul.mubr.bf16.gmra.mrb[0].mxu0 %v251
        %v301 = vpop.f32.mrb[0].mxu0
        %v302 = vadd.f32 0.0, %v301
        %v303 = vpop.f32.mrb[0].mxu0
        %v304 = vpop.f32.mrb[0].mxu0
        %v305 = vadd.f32 0.0, %v304
        %v306 = vpop.f32.mrb[0].mxu0
        %307 = vmatprep.mubr.bf16.mxu0 0
        %308 = vmatmul.mubr.bf16.gmra.mrb[0].mxu0 %v254
        %v309 = vpop.f32.mrb[0].mxu0
        %v310 = vadd.f32 0.0, %v309
        %v311 = vpop.f32.mrb[0].mxu0
        %v312 = vpop.f32.mrb[0].mxu0
        %v313 = vadd.f32 0.0, %v312
        %v314 = vpop.f32.mrb[0].mxu0
        %315 = vmatprep.mubr.bf16.mxu0 0
        %316 = vmatmul.mubr.bf16.gmra.mrb[0].mxu0 %v257
        %v317 = vpop.f32.mrb[0].mxu0
        %v318 = vadd.f32 0.0, %v317
        %v319 = vpop.f32.mrb[0].mxu0
        %v320 = vpop.f32.mrb[0].mxu0
        %v321 = vadd.f32 0.0, %v320
        %v322 = vpop.f32.mrb[0].mxu0
        %323 = vdwg.mxu0
        %324 = vst.msk [vmem:[#allocation2] sm:$0xff] %vm246, %v294
        %325 = vst.msk [vmem:[#allocation2 + $0x8] sm:$0xff] %vm246, %v297
        %326 = vst.msk [vmem:[#allocation2 + $0x10] sm:$0xff] %vm246, %v302
        %327 = vst.msk [vmem:[#allocation2 + $0x18] sm:$0xff] %vm246, %v305
        %328 = vst.msk [vmem:[#allocation2 + $0x20] sm:$0xff] %vm246, %v310
        %329 = vst.msk [vmem:[#allocation2 + $0x28] sm:$0xff] %vm246, %v313
        %330 = vst.msk [vmem:[#allocation2 + $0x30] sm:$0xff] %vm246, %v318
        %331 = vst.msk [vmem:[#allocation2 + $0x38] sm:$0xff] %vm246, %v321
        %v332 = vld [vmem:[#allocation2] sm:$0xff]
        %v333 = vld [vmem:[#allocation2 + $0x8] sm:$0xff]
        %vm334 = vcmask 64512
        %335 = vst.msk [vmem:[#allocation3] sm:$0xff] %vm334, %v332
        %336 = vst.msk [vmem:[#allocation3 + $0x8] sm:$0xff] %vm334, %v333
        %v337 = vld [vmem:[#allocation2 + $0x10] sm:$0xff]
        %v338 = vld [vmem:[#allocation2 + $0x18] sm:$0xff]
        %341 = vrot.lane.b32.xlu0 %v337, 8
        %v342 = vpop.permute.xlu0 %341
        %343 = vrot.lane.b32.xlu0 %v338, 8
        %v344 = vpop.permute.xlu0 %343
        %vm347 = vcmask 130112
        %348 = vst.msk [vmem:[#allocation3] sm:$0xff] %vm347, %v342
        %349 = vst.msk [vmem:[#allocation3 + $0x8] sm:$0xff] %vm347, %v344
        %v350 = vld [vmem:[#allocation2 + $0x20] sm:$0xff]
        %v351 = vld [vmem:[#allocation2 + $0x28] sm:$0xff]
        %354 = vrot.lane.b32.xlu0 %v350, 16
        %v355 = vpop.permute.xlu0 %354
        %356 = vrot.lane.b32.xlu0 %v351, 16
        %v357 = vpop.permute.xlu0 %356
        %vm360 = vcmask 195712
        %361 = vst.msk [vmem:[#allocation3] sm:$0xff] %vm360, %v355
        %362 = vst.msk [vmem:[#allocation3 + $0x8] sm:$0xff] %vm360, %v357
        %v363 = vld [vmem:[#allocation2 + $0x30] sm:$0xff]
        %v364 = vld [vmem:[#allocation2 + $0x38] sm:$0xff]
        %367 = vrot.lane.b32.xlu0 %v363, 24
        %v368 = vpop.permute.xlu0 %367
        %369 = vrot.lane.b32.xlu0 %v364, 24
        %v370 = vpop.permute.xlu0 %369
        %vm373 = vcmask 261312
        %374 = vst.msk [vmem:[#allocation3] sm:$0xff] %vm373, %v368
        %375 = vst.msk [vmem:[#allocation3 + $0x8] sm:$0xff] %vm373, %v370
        %v376 = vld [vmem:[%s198] sm:$0xff]
        %v377 = vld [vmem:[#allocation3] sm:$0xff]
        %v378 = vld [vmem:[#allocation3 + $0x8] sm:$0xff]
        %v380 = vsel %vm246, %v376, 0
        %382 = vmatprep.subr.mxu0 0.0
        %383 = vmatpush1.msra.mxu0 %v377
        %384 = vmatprep.subr.mxu0 0.0
        %385 = vmatpush1.msra.mxu0 %v378
        %386 = vmatprep.subr.mxu0 0.0
        %387 = vmatpush1.msra.mxu0 0.0
        %388 = vmatprep.subr.mxu0 0.0
        %389 = vmatpush1.msra.mxu0 0.0
        %390 = vmatprep.subr.mxu0 0.0
        %391 = vmatpush1.msra.mxu0 0.0
        %392 = vmatprep.subr.mxu0 0.0
        %393 = vmatpush1.msra.mxu0 0.0
        %394 = vmatprep.subr.mxu0 0.0
        %395 = vmatpush1.msra.mxu0 0.0
        %396 = vmatprep.subr.mxu0 0.0
        %397 = vmatpush1.msra.mxu0 0.0
        %398 = vmatprep.subr.mxu0 0.0
        %399 = vmatpush1.msra.mxu0 0.0
        %400 = vmatprep.subr.mxu0 0.0
        %401 = vmatpush1.msra.mxu0 0.0
        %402 = vmatprep.subr.mxu0 0.0
        %403 = vmatpush1.msra.mxu0 0.0
        %404 = vmatprep.subr.mxu0 0.0
        %405 = vmatpush1.msra.mxu0 0.0
        %406 = vmatprep.subr.mxu0 0.0
        %407 = vmatpush1.msra.mxu0 0.0
        %408 = vmatprep.subr.mxu0 0.0
        %409 = vmatpush1.msra.mxu0 0.0
        %410 = vmatprep.subr.mxu0 0.0
        %411 = vmatpush1.msra.mxu0 0.0
        %412 = vmatprep.subr.mxu0 0.0
        %413 = vmatpush1.msra.mxu0 0.0
        %414 = vmatprep.subr.mxu0 0.0
        %415 = vmatpush1.msra.mxu0 0.0
        %416 = vmatprep.subr.mxu0 0.0
        %417 = vmatpush1.msra.mxu0 0.0
        %418 = vmatprep.subr.mxu0 0.0
        %419 = vmatpush1.msra.mxu0 0.0
        %420 = vmatprep.subr.mxu0 0.0
        %421 = vmatpush1.msra.mxu0 0.0
        %422 = vmatprep.subr.mxu0 0.0
        %423 = vmatpush1.msra.mxu0 0.0
        %424 = vmatprep.subr.mxu0 0.0
        %425 = vmatpush1.msra.mxu0 0.0
        %426 = vmatprep.subr.mxu0 0.0
        %427 = vmatpush1.msra.mxu0 0.0
        %428 = vmatprep.subr.mxu0 0.0
        %429 = vmatpush1.msra.mxu0 0.0
        %430 = vmatprep.subr.mxu0 0.0
        %431 = vmatpush1.msra.mxu0 0.0
        %432 = vmatprep.subr.mxu0 0.0
        %433 = vmatpush1.msra.mxu0 0.0
        %434 = vmatprep.subr.mxu0 0.0
        %435 = vmatpush1.msra.mxu0 0.0
        %436 = vmatprep.subr.mxu0 0.0
        %437 = vmatpush1.msra.mxu0 0.0
        %438 = vmatprep.subr.mxu0 0.0
        %439 = vmatpush1.msra.mxu0 0.0
        %440 = vmatprep.subr.mxu0 0.0
        %441 = vmatpush1.msra.mxu0 0.0
        %442 = vmatprep.subr.mxu0 0.0
        %443 = vmatpush1.msra.mxu0 0.0
        %444 = vmatprep.subr.mxu0 0.0
        %445 = vmatpush1.msra.mxu0 0.0
        %446 = vmatprep.mubr.f32.mxu0 0.0
        %447 = vmatmul.mubr.f32.gmra.mrb[0].mxu0 %v380
        %v448 = vpop.f32.mrb[0].mxu0
        %v449 = vadd.f32 0.0, %v448
        %v450 = vpop.f32.mrb[0].mxu0
        %451 = vdwg.mxu0
        %vm452 = vcmask 261120
        %453 = vst.msk [vmem:[%s193] sm:$0xff] %vm452, %v449
        %v454 = vld [vmem:[#allocation2] sm:$0xff]
        %v455 = vld [vmem:[#allocation2 + $0x8] sm:$0xff]
        %458 = vrot.lane.b32.xlu0 %v454, 120
        %v459 = vpop.permute.xlu0 %458
        %460 = vrot.lane.b32.xlu0 %v455, 120
        %v461 = vpop.permute.xlu0 %460
        %464 = vst.msk [vmem:[#allocation3] sm:$0xff] %vm334, %v459
        %465 = vst.msk [vmem:[#allocation3 + $0x8] sm:$0xff] %vm334, %v461
        %v466 = vld [vmem:[#allocation2 + $0x10] sm:$0xff]
        %v467 = vld [vmem:[#allocation2 + $0x18] sm:$0xff]
        %468 = vst.msk [vmem:[#allocation3] sm:$0xff] %vm347, %v466
        %469 = vst.msk [vmem:[#allocation3 + $0x8] sm:$0xff] %vm347, %v467
        %v470 = vld [vmem:[#allocation2 + $0x20] sm:$0xff]
        %v471 = vld [vmem:[#allocation2 + $0x28] sm:$0xff]
        %474 = vrot.lane.b32.xlu0 %v470, 8
        %v475 = vpop.permute.xlu0 %474
        %476 = vrot.lane.b32.xlu0 %v471, 8
        %v477 = vpop.permute.xlu0 %476
        %480 = vst.msk [vmem:[#allocation3] sm:$0xff] %vm360, %v475
        %481 = vst.msk [vmem:[#allocation3 + $0x8] sm:$0xff] %vm360, %v477
        %v482 = vld [vmem:[#allocation2 + $0x30] sm:$0xff]
        %v483 = vld [vmem:[#allocation2 + $0x38] sm:$0xff]
        %486 = vrot.lane.b32.xlu0 %v482, 16
        %v487 = vpop.permute.xlu0 %486
        %488 = vrot.lane.b32.xlu0 %v483, 16
        %v489 = vpop.permute.xlu0 %488
        %492 = vst.msk [vmem:[#allocation3] sm:$0xff] %vm373, %v487
        %493 = vst.msk [vmem:[#allocation3 + $0x8] sm:$0xff] %vm373, %v489
        %s494 = scalar_lea.vmem %s198, 8
        %v495 = vld [vmem:[%s494] sm:$0xff]
        %v496 = vld [vmem:[#allocation3] sm:$0xff]
        %v497 = vld [vmem:[#allocation3 + $0x8] sm:$0xff]
        %v499 = vsel %vm246, %v495, 0
        %501 = vmatprep.subr.mxu0 0.0
        %502 = vmatpush1.msra.mxu0 %v496
        %503 = vmatprep.subr.mxu0 0.0
        %504 = vmatpush1.msra.mxu0 %v497
        %505 = vmatprep.subr.mxu0 0.0
        %506 = vmatpush1.msra.mxu0 0.0
        %507 = vmatprep.subr.mxu0 0.0
        %508 = vmatpush1.msra.mxu0 0.0
        %509 = vmatprep.subr.mxu0 0.0
        %510 = vmatpush1.msra.mxu0 0.0
        %511 = vmatprep.subr.mxu0 0.0
        %512 = vmatpush1.msra.mxu0 0.0
        %513 = vmatprep.subr.mxu0 0.0
        %514 = vmatpush1.msra.mxu0 0.0
        %515 = vmatprep.subr.mxu0 0.0
        %516 = vmatpush1.msra.mxu0 0.0
        %517 = vmatprep.subr.mxu0 0.0
        %518 = vmatpush1.msra.mxu0 0.0
        %519 = vmatprep.subr.mxu0 0.0
        %520 = vmatpush1.msra.mxu0 0.0
        %521 = vmatprep.subr.mxu0 0.0
        %522 = vmatpush1.msra.mxu0 0.0
        %523 = vmatprep.subr.mxu0 0.0
        %524 = vmatpush1.msra.mxu0 0.0
        %525 = vmatprep.subr.mxu0 0.0
        %526 = vmatpush1.msra.mxu0 0.0
        %527 = vmatprep.subr.mxu0 0.0
        %528 = vmatpush1.msra.mxu0 0.0
        %529 = vmatprep.subr.mxu0 0.0
        %530 = vmatpush1.msra.mxu0 0.0
        %531 = vmatprep.subr.mxu0 0.0
        %532 = vmatpush1.msra.mxu0 0.0
        %533 = vmatprep.subr.mxu0 0.0
        %534 = vmatpush1.msra.mxu0 0.0
        %535 = vmatprep.subr.mxu0 0.0
        %536 = vmatpush1.msra.mxu0 0.0
        %537 = vmatprep.subr.mxu0 0.0
        %538 = vmatpush1.msra.mxu0 0.0
        %539 = vmatprep.subr.mxu0 0.0
        %540 = vmatpush1.msra.mxu0 0.0
        %541 = vmatprep.subr.mxu0 0.0
        %542 = vmatpush1.msra.mxu0 0.0
        %543 = vmatprep.subr.mxu0 0.0
        %544 = vmatpush1.msra.mxu0 0.0
        %545 = vmatprep.subr.mxu0 0.0
        %546 = vmatpush1.msra.mxu0 0.0
        %547 = vmatprep.subr.mxu0 0.0
        %548 = vmatpush1.msra.mxu0 0.0
        %549 = vmatprep.subr.mxu0 0.0
        %550 = vmatpush1.msra.mxu0 0.0
        %551 = vmatprep.subr.mxu0 0.0
        %552 = vmatpush1.msra.mxu0 0.0
        %553 = vmatprep.subr.mxu0 0.0
        %554 = vmatpush1.msra.mxu0 0.0
        %555 = vmatprep.subr.mxu0 0.0
        %556 = vmatpush1.msra.mxu0 0.0
        %557 = vmatprep.subr.mxu0 0.0
        %558 = vmatpush1.msra.mxu0 0.0
        %559 = vmatprep.subr.mxu0 0.0
        %560 = vmatpush1.msra.mxu0 0.0
        %561 = vmatprep.subr.mxu0 0.0
        %562 = vmatpush1.msra.mxu0 0.0
        %563 = vmatprep.subr.mxu0 0.0
        %564 = vmatpush1.msra.mxu0 0.0
        %565 = vmatprep.mubr.f32.mxu0 0.0
        %566 = vmatmul.mubr.f32.gmra.mrb[0].mxu0 %v499
        %v567 = vpop.f32.mrb[0].mxu0
        %v568 = vadd.f32 0.0, %v567
        %v569 = vpop.f32.mrb[0].mxu0
        %570 = vdwg.mxu0
        %s571 = scalar_lea.vmem %s193, 8 [#allocation4]
        %572 = vst.msk [vmem:[%s571] sm:$0xff] %vm452, %v568
        %s573 = sand.u32 %s103, 1
        %s574 = scalar_lea.sflag [#allocation5], %s573
        %s575 = sand.u32 %s103, 1
        %s576 = smul.addr %s575, 16
        %s577 = scalar_lea.vmem [#allocation4], %s576
        // Predicated region
        $region33: #{tpu_custom_call.1} parent=31 // pred_check
          %p578 = pneg %p113
        $region34: #{tpu_custom_call.1} parent=31 // pred_check_branch
          %580 = sbr.rel (%p578) target = $region36
        $region35: #{tpu_custom_call.1} parent=31 // pred_region
          %s582 = ssub.s32 256, 256
          %583 = vsyncadd %s574, %s582
          %s584 = smul.addr %s17, 2
          %s585 = smul.addr %s584, 128
          %s586 = scalar_lea.hbm %s3, %s585
          %s587 = sshll.u32 %s577, 4
          %s588 = int_to_ptr.vmem [resolvable:$true] %s587
          %593 = dma.vmem_to_hbm [thread:$0]  %s588, 256, %s586, %s574, 128, 128, 8
        $region36: #{tpu_custom_call.1} parent=31 // pred_fallthru
          _
      $region32: #{tpu_custom_call.1} parent=5 // pred_fallthru
        _
      %p594 = scmp.le.s32.totalorder 2, %s12
      // Predicated region
      $region37: #{tpu_custom_call.1} parent=5 // pred_check
        %p595 = pneg %p594
      $region38: #{tpu_custom_call.1} parent=5 // pred_check_branch
        %597 = sbr.rel (%p595) target = $region40
      $region39: #{tpu_custom_call.1} parent=5 // pred_region
        %s598 = ssub.s32 %s12, 2
        // Predicated region
        $region41: #{tpu_custom_call.1} parent=39 // pred_check
          %p599 = pneg %p119
        $region42: #{tpu_custom_call.1} parent=39 // pred_check_branch
          %601 = sbr.rel (%p599) target = $region44
        $region43: #{tpu_custom_call.1} parent=39 // pred_region
          %s602 = sand.u32 %s104, 1
          %s603 = scalar_lea.sflag [#allocation5], %s602
          %s604 = sand.u32 %s104, 1
          %s605 = smul.addr %s604, 16
          %s606 = scalar_lea.vmem [#allocation4], %s605
          %607 = dma.done %s603, 256
        $region44: #{tpu_custom_call.1} parent=39 // pred_fallthru
          _
      $region40: #{tpu_custom_call.1} parent=5 // pred_fallthru
        _
    $region6: #{tpu_custom_call.1} parent=1 // loop_footer
      %s16 = sadd.s32 1, %s12
    $region7: #{tpu_custom_call.1} parent=1 // loop_footer_branch
      %11 = sbr.rel target = $region3
    $region8: #{tpu_custom_call.1} parent=1 // loop_exit
      _
    %608 = vsyncpa [#allocation5], 1
    %s609 = scalar_lea.sflag [#allocation5], 1
    %610 = vsyncpa %s609, 1

</llo_original>
